<compile_context>
chip_gen: v7x
topology: tpu7x:2x2x1
jax: 0.10.0
libtpu: 0.0.40
codegen_flags: <defaults>
</compile_context>

<pallas_src>
from functools import partial

import jax
import jax.numpy as jnp
from jax import lax
from jax.experimental import pallas as pl
from jax.experimental.pallas import tpu as pltpu

SELU_ALPHA = 1.6732632423543772848170429916717
SELU_SCALE = 1.0507009873554804934193349852946
BN_EPS = 1e-5
LANE = 128   # pad every channel dim to one full vreg lane width (lane-dense ops/stores)


# ----------------------------------- kernel ---------------------------------------

def dwres_kernel(x_ref, w_ref, o_ref, *, seq_len):
    x = x_ref[0]                                   # (R, LANE) bf16; R = rows per chunk
    R = x.shape[0]

    # Temporal taps of the (k=3, stride=1, pad=1) conv: deterministic sublane shifts
    # (zero-row concat) + per-sequence boundary masks (batch is collapsed into rows,
    # so row i belongs to sequence position i % seq_len).
    zero_row = jnp.zeros((1, LANE), x.dtype)
    x_prev = jnp.concatenate([zero_row, x[:R - 1, :]], axis=0)   # row i <- x[i-1]
    x_next = jnp.concatenate([x[1:, :], zero_row], axis=0)       # row i <- x[i+1]
    pos = lax.broadcasted_iota(jnp.int32, (R, 1), 0) % seq_len
    x_prev = x_prev * (pos != 0).astype(x.dtype)                 # zero-pad at seq start
    x_next = x_next * (pos != seq_len - 1).astype(x.dtype)       # zero-pad at seq end

    # Entire block (conv1 -> BN -> conv3 -> BN -> conv2 -> BN, + downsample on the
    # centre tap) folded into one stacked weight at wrapper time: three accumulating
    # bf16 MXU dots with f32 accumulation.
    y = (jnp.dot(x_prev, w_ref[0], preferred_element_type=jnp.float32)
         + jnp.dot(x,      w_ref[1], preferred_element_type=jnp.float32)
         + jnp.dot(x_next, w_ref[2], preferred_element_type=jnp.float32))
    # TODO(synk): non-identity BN shifts need a fused bias row plus first/last-row
    #             corrections for the b1 term; they are exactly zero in this config.
    # TODO(synk): training-mode dropout RNG mask (pltpu.prng_*) not implemented
    #             (identity at inference).

    # SELU (f32 elementwise; negative branch via exp-1, kept for lowering safety).
    out = SELU_SCALE * jnp.where(y > 0, y, SELU_ALPHA * (jnp.exp(y) - 1.0))
    o_ref[0] = out.astype(o_ref.dtype)             # lane-dense 128-wide store


# ----------------------------- wrapper / weight prep --------------------------------

def _expand_grouped_pointwise(w, groups):
    """Grouped (Cout, Cin_per_group) conv weight -> dense block-diag (Cin, Cout): y = x @ W."""
    Cout, Cin_g = w.shape
    Cout_g = Cout // groups
    Cin = Cin_g * groups
    full = jnp.zeros((Cin, Cout), jnp.float32)
    for g in range(groups):
        full = full.at[g * Cin_g:(g + 1) * Cin_g,
                       g * Cout_g:(g + 1) * Cout_g].set(w[g * Cout_g:(g + 1) * Cout_g, :].T)
    return full


def _bn_fold(c):
    """Inference BN (gamma=1, beta=0, mean=0, var=1, eps=1e-5) -> per-channel scale/shift."""
    scale = jnp.ones((c,), jnp.float32) / jnp.sqrt(1.0 + BN_EPS)
    shift = jnp.zeros((c,), jnp.float32)
    return scale, shift


def _pad2(w, rows, cols):
    return jnp.zeros((rows, cols), jnp.float32).at[:w.shape[0], :w.shape[1]].set(w)


def init_params(key, in_planes, out_planes, groups, expansion=3):
    cexp = out_planes * expansion
    k1, k2, k3, k4 = jax.random.split(key, 4)

    def kaiming(k, shape, fan_in):
        return jax.random.normal(k, shape, jnp.float32) * jnp.sqrt(2.0 / fan_in)

    raw = dict(
        w1=kaiming(k1, (out_planes, in_planes // groups), in_planes // groups),
        w3=kaiming(k2, (out_planes, out_planes // groups, 3), (out_planes // groups) * 3),
        w2=kaiming(k3, (cexp, out_planes // groups), out_planes // groups),
        wd=kaiming(k4, (cexp, in_planes // groups), in_planes // groups),
    )

    # Inference BN scales folded into the weights (shifts are exactly zero here).
    s1, _ = _bn_fold(out_planes)
    s2, _ = _bn_fold(out_planes)
    s3, _ = _bn_fold(cexp)
    sd, _ = _bn_fold(cexp)

    w1_f = _expand_grouped_pointwise(raw["w1"], groups) * s1[None, :]     # (Cin, Cmid)
    w2_f = _expand_grouped_pointwise(raw["w2"], groups) * s3[None, :]     # (Cmid, Cexp)
    wd_f = _expand_grouped_pointwise(raw["wd"], groups) * sd[None, :]     # (Cin, Cexp)

    hp = lax.Precision.HIGHEST
    taps = []
    for t in range(3):
        wt = _expand_grouped_pointwise(raw["w3"][:, :, t], groups) * s2[None, :]  # (Cmid, Cmid)
        taps.append(jnp.dot(jnp.dot(w1_f, wt, precision=hp), w2_f, precision=hp))  # (Cin, Cexp)
    taps[1] = taps[1] + wd_f          # downsample 1x1 rides on the centre (current-step) tap

    # Pad each tap to a lane-dense (LANE, LANE) block and stack -> (3, LANE, LANE) bf16.
    w_eff = jnp.stack([_pad2(t, LANE, LANE) for t in taps], axis=0).astype(jnp.bfloat16)
    return w_eff, raw


@partial(jax.jit, static_argnames=("cexp", "batch_chunks"))
def dwresblock_pallas(x_ncl, w_eff, *, cexp, batch_chunks=1):
    """x_ncl: (B, Cin, L) like the PyTorch module. Returns (B, out_planes*expansion, L).

    batch_chunks=1 (default) processes all B*L rows in one program -- best at this size
    on every generation.  batch_chunks>1 splits rows at sequence boundaries across
    "parallel" programs (only worthwhile once rows per chunk is a few hundred+).
    """
    B, Cin, L = x_ncl.shape
    assert B % batch_chunks == 0, "batch_chunks must divide the batch"
    rows = (B // batch_chunks) * L                     # whole sequences per chunk

    # channels-last, lane-pad to 128, bf16, batch collapsed into rows (fuses under jit).
    x_blc = jnp.transpose(x_ncl, (0, 2, 1)).astype(jnp.bfloat16)          # (B, L, Cin)
    x_pad = jnp.zeros((B, L, LANE), jnp.bfloat16).at[:, :, :Cin].set(x_blc)
    x_pad = x_pad.reshape(batch_chunks, rows, LANE)

    out = pl.pallas_call(
        partial(dwres_kernel, seq_len=L),
        out_shape=jax.ShapeDtypeStruct((batch_chunks, rows, LANE), jnp.float32),
        grid=(batch_chunks,),
        in_specs=[pl.BlockSpec((1, rows, LANE), lambda i: (i, 0, 0)),
                  pl.BlockSpec((3, LANE, LANE), lambda i: (0, 0, 0))],   # replicated weights
        out_specs=pl.BlockSpec((1, rows, LANE), lambda i: (i, 0, 0)),
        compiler_params=pltpu.CompilerParams(dimension_semantics=("parallel",)),
        # NOTE: ~98 KB bf16 weights + ~30 KB activations -- far under every generation's
        # scoped VMEM; re-derive (v7x 64 MiB physical / 32 MiB scoped, v5e 16 MiB scoped)
        # and switch to a row-tiled grid before scaling B*L up.
    )(x_pad, w_eff)

    out = out.reshape(B, L, LANE)[:, :, :cexp]         # drop lane padding after the store
    return jnp.transpose(out, (0, 2, 1))


# ------------------------------- pure-JAX reference -------------------------------

def ref_forward(x_ncl, raw, groups):
    def conv(x, w, padding):
        return lax.conv_general_dilated(
            x, w, window_strides=(1,), padding=[(padding, padding)],
            dimension_numbers=("NCH", "OIH", "NCH"),
            feature_group_count=groups, precision=lax.Precision.HIGHEST)

    def bn(x):  # gamma=1, beta=0, running_mean=0, running_var=1 (inference)
        return x / jnp.sqrt(1.0 + BN_EPS)

    out = bn(conv(x_ncl, raw["w1"][:, :, None], 0))
    out = bn(conv(out, raw["w3"], 1))
    out = bn(conv(out, raw["w2"][:, :, None], 0))
    idn = bn(conv(x_ncl, raw["wd"][:, :, None], 0))
    out = out + idn
    return SELU_SCALE * jnp.where(out > 0, out, SELU_ALPHA * (jnp.exp(out) - 1.0))


if __name__ == "__main__":
    # DWResBlock(in_planes=8, out_planes=8, kernel_size=3, stride=1, groups=2, input_length=20)
    B, IN_PLANES, OUT_PLANES, GROUPS, L = 2, 8, 8, 2, 20
    CEXP = OUT_PLANES * 3
    key = jax.random.PRNGKey(0)
    kx, kp = jax.random.split(key)
    x = jax.random.normal(kx, (B, IN_PLANES, L), jnp.float32)

    w_eff, raw = init_params(kp, IN_PLANES, OUT_PLANES, GROUPS)

    out = dwresblock_pallas(x, w_eff, cexp=CEXP, batch_chunks=1)
    out = jax.block_until_ready(out)

    ref = ref_forward(x, raw, GROUPS)
    assert out.shape == (B, CEXP, L), out.shape
    # Tolerance: single fused bf16-operand matmul (f32 accumulation) vs f32 HIGHEST
    # reference; worst-case per-element rounding over the ~16-term dot is a few e-2
    # absolute near |out| ~ 0, hence the atol.
    if not jnp.allclose(out, ref, rtol=2e-2, atol=5e-2):
        max_err = float(jnp.max(jnp.abs(out - ref)))
        raise AssertionError(
            f"Pallas kernel output mismatch vs JAX reference (max abs err {max_err:.4f})")
    print("KERNEL_OK")
</pallas_src>

<mosaic_0001>
module attributes {stable_mosaic.version = 11 : i64} {
  func.func @dwres_kernel(%arg0: i32, %arg1: memref<1x40x128xbf16, #tpu.memory_space<vmem>>, %arg2: memref<3x128x128xbf16, #tpu.memory_space<vmem>>, %arg3: memref<1x40x128xf32, #tpu.memory_space<vmem>>) attributes {dimension_semantics = [#tpu.dimension_semantics<parallel>], iteration_bounds = array<i64: 1>, scalar_prefetch = 0 : i64, scratch_operands = 0 : i64, tpu.core_type = #tpu.core_type<tc>, window_params = [{transform_indices = @transform_0, window_bounds = array<i64: 1, 40, 128>}, {pipeline_mode = #tpu.pipeline_mode<synchronous>, transform_indices = @transform_1, window_bounds = array<i64: 3, 128, 128>}, {transform_indices = @transform_2, window_bounds = array<i64: 1, 40, 128>}]} {
    %c0 = arith.constant 0 : index
    %c0_0 = arith.constant 0 : index
    %c0_1 = arith.constant 0 : index
    %0 = vector.load %arg1[%c0, %c0_0, %c0_1] : memref<1x40x128xbf16, #tpu.memory_space<vmem>>, vector<1x40x128xbf16>
    %1 = vector.shape_cast %0 : vector<1x40x128xbf16> to vector<40x128xbf16>
    %cst = arith.constant 0.000000e+00 : bf16
    %2 = vector.broadcast %cst : bf16 to vector<1x128xbf16>
    %3 = vector.extract_strided_slice %1 {offsets = [0, 0], sizes = [39, 128], strides = [1, 1]} : vector<40x128xbf16> to vector<39x128xbf16>
    %4 = tpu.concatenate %2, %3 in 0 : vector<1x128xbf16>, vector<39x128xbf16> -> vector<40x128xbf16>
    %5 = vector.extract_strided_slice %1 {offsets = [1, 0], sizes = [39, 128], strides = [1, 1]} : vector<40x128xbf16> to vector<39x128xbf16>
    %6 = tpu.concatenate %5, %2 in 0 : vector<39x128xbf16>, vector<1x128xbf16> -> vector<40x128xbf16>
    %7 = tpu.iota {dimensions = array<i32: 0>} : vector<40x1xi32>
    %c20_i32 = arith.constant 20 : i32
    %c0_i32 = arith.constant 0 : i32
    %8 = arith.cmpi eq, %c20_i32, %c0_i32 : i32
    %c1_i32 = arith.constant 1 : i32
    %9 = arith.select %8, %c1_i32, %c20_i32 : i32
    %10 = vector.broadcast %9 : i32 to vector<40x1xi32>
    %11 = arith.remsi %7, %10 : vector<40x1xi32>
    %c0_i32_2 = arith.constant 0 : i32
    %12 = vector.broadcast %c0_i32_2 : i32 to vector<40x1xi32>
    %13 = arith.cmpi ne, %11, %12 : vector<40x1xi32>
    %c0_i32_3 = arith.constant 0 : i32
    %14 = vector.broadcast %c0_i32_3 : i32 to vector<40x1xi32>
    %15 = arith.cmpi slt, %11, %14 : vector<40x1xi32>
    %c0_i32_4 = arith.constant 0 : i32
    %16 = arith.cmpi slt, %9, %c0_i32_4 : i32
    %17 = vector.broadcast %16 : i1 to vector<40x1xi1>
    %18 = vector.broadcast %17 : vector<40x1xi1> to vector<40x1xi1>
    %19 = arith.xori %15, %18 : vector<40x1xi1>
    %20 = arith.andi %19, %13 : vector<40x1xi1>
    %21 = vector.broadcast %9 : i32 to vector<40x1xi32>
    %22 = arith.addi %11, %21 : vector<40x1xi32>
    %23 = arith.select %20, %22, %11 : vector<40x1xi1>, vector<40x1xi32>
    %c0_i32_5 = arith.constant 0 : i32
    %24 = vector.broadcast %c0_i32_5 : i32 to vector<40x1xi32>
    %25 = arith.cmpi ne, %23, %24 : vector<40x1xi32>
    %26 = arith.extui %25 : vector<40x1xi1> to vector<40x1xi32>
    %27 = arith.sitofp %26 : vector<40x1xi32> to vector<40x1xf32>
    %28 = arith.truncf %27 : vector<40x1xf32> to vector<40x1xbf16>
    %29 = vector.broadcast %28 : vector<40x1xbf16> to vector<40x128xbf16>
    %30 = arith.mulf %4, %29 : vector<40x128xbf16>
    %c19_i32 = arith.constant 19 : i32
    %31 = vector.broadcast %c19_i32 : i32 to vector<40x1xi32>
    %32 = arith.cmpi ne, %23, %31 : vector<40x1xi32>
    %33 = arith.extui %32 : vector<40x1xi1> to vector<40x1xi32>
    %34 = arith.sitofp %33 : vector<40x1xi32> to vector<40x1xf32>
    %35 = arith.truncf %34 : vector<40x1xf32> to vector<40x1xbf16>
    %36 = vector.broadcast %35 : vector<40x1xbf16> to vector<40x128xbf16>
    %37 = arith.mulf %6, %36 : vector<40x128xbf16>
    %c0_6 = arith.constant 0 : index
    %c0_7 = arith.constant 0 : index
    %c0_8 = arith.constant 0 : index
    %38 = vector.load %arg2[%c0_6, %c0_7, %c0_8] : memref<3x128x128xbf16, #tpu.memory_space<vmem>>, vector<1x128x128xbf16>
    %39 = vector.shape_cast %38 : vector<1x128x128xbf16> to vector<128x128xbf16>
    %cst_9 = arith.constant dense<0.000000e+00> : vector<40x128xf32>
    %40 = tpu.matmul %30, %39, %cst_9 {dimension_numbers = #tpu.dot_dimension_numbers<[1], [0], [0], [1], [0, 0, 1, 1], [], []>} : vector<40x128xbf16>, vector<128x128xbf16>, vector<40x128xf32> -> vector<40x128xf32>
    %c1 = arith.constant 1 : index
    %c0_10 = arith.constant 0 : index
    %c0_11 = arith.constant 0 : index
    %41 = vector.load %arg2[%c1, %c0_10, %c0_11] : memref<3x128x128xbf16, #tpu.memory_space<vmem>>, vector<1x128x128xbf16>
    %42 = vector.shape_cast %41 : vector<1x128x128xbf16> to vector<128x128xbf16>
    %cst_12 = arith.constant dense<0.000000e+00> : vector<40x128xf32>
    %43 = tpu.matmul %1, %42, %cst_12 {dimension_numbers = #tpu.dot_dimension_numbers<[1], [0], [0], [1], [0, 0, 1, 1], [], []>} : vector<40x128xbf16>, vector<128x128xbf16>, vector<40x128xf32> -> vector<40x128xf32>
    %44 = arith.addf %40, %43 : vector<40x128xf32>
    %c2 = arith.constant 2 : index
    %c0_13 = arith.constant 0 : index
    %c0_14 = arith.constant 0 : index
    %45 = vector.load %arg2[%c2, %c0_13, %c0_14] : memref<3x128x128xbf16, #tpu.memory_space<vmem>>, vector<1x128x128xbf16>
    %46 = vector.shape_cast %45 : vector<1x128x128xbf16> to vector<128x128xbf16>
    %cst_15 = arith.constant dense<0.000000e+00> : vector<40x128xf32>
    %47 = tpu.matmul %37, %46, %cst_15 {dimension_numbers = #tpu.dot_dimension_numbers<[1], [0], [0], [1], [0, 0, 1, 1], [], []>} : vector<40x128xbf16>, vector<128x128xbf16>, vector<40x128xf32> -> vector<40x128xf32>
    %48 = arith.addf %44, %47 : vector<40x128xf32>
    %cst_16 = arith.constant 0.000000e+00 : f32
    %49 = vector.broadcast %cst_16 : f32 to vector<40x128xf32>
    %50 = arith.cmpf ogt, %48, %49 : vector<40x128xf32>
    %51 = math.exp %48 : vector<40x128xf32>
    %cst_17 = arith.constant 1.000000e+00 : f32
    %52 = vector.broadcast %cst_17 : f32 to vector<40x128xf32>
    %53 = arith.subf %51, %52 : vector<40x128xf32>
    %cst_18 = arith.constant 1.67326319 : f32
    %54 = vector.broadcast %cst_18 : f32 to vector<40x128xf32>
    %55 = arith.mulf %54, %53 : vector<40x128xf32>
    %56 = arith.select %50, %48, %55 : vector<40x128xi1>, vector<40x128xf32>
    %cst_19 = arith.constant 1.05070102 : f32
    %57 = vector.broadcast %cst_19 : f32 to vector<40x128xf32>
    %58 = arith.mulf %57, %56 : vector<40x128xf32>
    %c0_20 = arith.constant 0 : index
    %c0_21 = arith.constant 0 : index
    %c0_22 = arith.constant 0 : index
    %59 = vector.load %arg3[%c0_20, %c0_21, %c0_22] : memref<1x40x128xf32, #tpu.memory_space<vmem>>, vector<1x40x128xf32>
    %60 = vector.shape_cast %59 : vector<1x40x128xf32> to vector<40x128xf32>
    %61 = vector.shape_cast %58 : vector<40x128xf32> to vector<1x40x128xf32>
    tpu.vector_store %arg3[%c0_20, %c0_21, %c0_22], %61 {strides = array<i32>} : memref<1x40x128xf32, #tpu.memory_space<vmem>>, vector<1x40x128xf32>,
    return
  }
  func.func @transform_0(%arg0: i32) -> (i32, i32, i32) {
    %c0_i32 = arith.constant 0 : i32
    %c0_i32_0 = arith.constant 0 : i32
    %c0_i32_1 = arith.constant 0 : i32
    return %arg0, %c0_i32, %c0_i32_0 : i32, i32, i32
  }
  func.func @transform_1(%arg0: i32) -> (i32, i32, i32) {
    %c0_i32 = arith.constant 0 : i32
    %c0_i32_0 = arith.constant 0 : i32
    %c0_i32_1 = arith.constant 0 : i32
    %c0_i32_2 = arith.constant 0 : i32
    return %c0_i32, %c0_i32_0, %c0_i32_1 : i32, i32, i32
  }
  func.func @transform_2(%arg0: i32) -> (i32, i32, i32) {
    %c0_i32 = arith.constant 0 : i32
    %c0_i32_0 = arith.constant 0 : i32
    %c0_i32_1 = arith.constant 0 : i32
    return %arg0, %c0_i32, %c0_i32_0 : i32, i32, i32
  }
}

</mosaic_0001>

<llo_original>
// kernel: dwresblock_pallas.1
$region0: #{dwresblock_pallas.1}
  #allocation0 [shape = 'u32[]', space=smem, size = 0x4, offset = 0x4, fixed_abs, tag = 'smem constant byte address 0x4 - core index']
  #allocation1 [shape = 'u32[144,128]{1,0:T(1,128)}', space=vmem, size = 0x12000, scoped, tag = 'internal scratch']
  %s0 = inlined_call_operand.vmem [shape: bf16[1,40,128], index: 0, kind: input, shape index: {}]
  %s1 = inlined_call_operand.hbm [shape: bf16[3,128,128], index: 1, kind: input, shape index: {}]
  %s2 = inlined_call_operand.vmem [shape: f32[1,40,128], index: 2, kind: output, shape index: {}]
  %s3 = sld [smem:[#allocation0]]
  $region22: #{dwresblock_pallas.1} parent=0
    _
  %s5 = ssub.s32 1, %s3
  %s6 = scalar_select 0, %s5, %s3
  $region1: #{dwresblock_pallas.1} parent=0
    #allocation2 [shape = 'u8[98304]{0}', space=vmem, size = 0x18000, scoped, tag = 'input window, operand 1, single buffered']
    #allocation3 [shape = 's32[1]{0}', space=sflag, size = 0x4, scoped, tag = 'scoped memory for dwresblock_pallas.1']
    %7 = vsyncpa [#allocation3], 0
    // Predicated region
    $region2: #{dwresblock_pallas.1} parent=1 // pred_check
      _
    $region3: #{dwresblock_pallas.1} parent=1 // pred_check_branch
      %9 = sbr.rel (0) target = $region5
    $region4: #{dwresblock_pallas.1} parent=1 // pred_region
      _
    $region5: #{dwresblock_pallas.1} parent=1 // pred_fallthru
      _
    // Predicated region
    $region6: #{dwresblock_pallas.1} parent=1 // pred_check
      _
    $region7: #{dwresblock_pallas.1} parent=1 // pred_check_branch
      %11 = sbr.rel (0) target = $region9
    $region8: #{dwresblock_pallas.1} parent=1 // pred_region
      %s13 = ssub.s32 3072, 3072
      %14 = vsyncadd [#allocation3], %s13
      %s15 = sshll.u32 [#allocation2], 4
      %s16 = int_to_ptr.vmem [resolvable:$true] %s15
      %21 = dma.hbm_to_vmem [thread:$0]  %s1, 3072, %s16, [#allocation3], 64, 64, 4
    $region9: #{dwresblock_pallas.1} parent=1 // pred_fallthru
      _
    // Predicated region
    $region10: #{dwresblock_pallas.1} parent=1 // pred_check
      _
    $region11: #{dwresblock_pallas.1} parent=1 // pred_check_branch
      %23 = sbr.rel (0) target = $region13
    $region12: #{dwresblock_pallas.1} parent=1 // pred_region
      %24 = dma.done [#allocation3], 3072
    $region13: #{dwresblock_pallas.1} parent=1 // pred_fallthru
      _
    %v26 = vld [vmem:[%s0] sm:$0xf]
    %v27 = vld [vmem:[%s0 + $0x4] sm:$0xf]
    %v28 = vld [vmem:[%s0 + $0x8] sm:$0xf]
    %v29 = vld [vmem:[%s0 + $0xc] sm:$0xf]
    %v30 = vld [vmem:[%s0 + $0x10] sm:$0xf]
    %v36 = vunpack.c.l.b16 %v26
    %v37 = vunpack.c.l.b16 %v27
    %v38 = vunpack.c.l.b16 %v28
    %v39 = vunpack.c.l.b16 %v29
    %v40 = vunpack.c.l.b16 %v30
    %v41 = vpack.c.b16 %v37, %v36
    %v42 = vpack.c.b16 %v39, %v38
    %v43 = vpack.c.b16 %v40, %v40
    %vm44 = vsmask.f32 256
    %v46 = vshrl.u32 %v41, 16
    %v48 = vrot.slane %v46, 7
    %v49 = vshll.u32 %v41, 16
    %v51 = vor.u32 %v48, %v49
    %v53 = vshrl.u32 %v42, 16
    %v55 = vrot.slane %v53, 7
    %v56 = vshll.u32 %v42, 16
    %v58 = vor.u32 %v55, %v56
    %v59 = vsel %vm44, %v48, %v58
    %v61 = vshrl.u32 %v43, 16
    %v63 = vrot.slane %v61, 7
    %v64 = vshll.u32 %v43, 16
    %v66 = vor.u32 %v63, %v64
    %v67 = vsel %vm44, %v55, %v66
    %vm71 = vcmask 1040384
    %vm72 = vmand %vm71, %vm44
    %v73 = vsel %vm72, 0, %v51
    %vm74 = vsmask.f32 7424
    %v75 = vrot.slane %v49, 1
    %v76 = vor.u32 %v46, %v75
    %v77 = vrot.slane %v56, 1
    %v78 = vsel %vm74, %v76, %v77
    %v79 = vor.u32 %v53, %v77
    %v80 = vrot.slane %v64, 1
    %v81 = vsel %vm74, %v79, %v80
    %v82 = vor.u32 %v61, %v80
    %vm86 = vcmask 1043456
    %vm87 = vsmask.f32 3328
    %vm88 = vmand %vm86, %vm87
    %v89 = vsel %vm88, %v82, 0
    %v90 = vlaneseq
    %v91 = vshrl.u32 %v90, 7
    %v92 = vadd.s32 %v91, 8
    %v93 = vadd.s32 %v91, 16
    %v94 = vadd.s32 %v91, 24
    %v95 = vadd.s32 %v91, 32
    %vm96 = vcmp.lt.s32.totalorder %v91, 0
    %v97 = vsub.s32 0, %v91
    %v98 = vsel %vm96, %v97, %v91
    %v99 = vmul.u32.u64.compose %v98, 3435973837
    %v100 = vextract.low.u32 %v99
    %v101 = vextract.high.u32 %v99
    %v102 = vshrl.u32 %v101, 4
    %v103 = vmul.u32 %v102, 20
    %v104 = vsub.s32 %v98, %v103
    %v105 = vsub.s32 0, %v104
    %v106 = vsel %vm96, %v105, %v104
    %vm107 = vcmp.lt.s32.totalorder %v92, 0
    %v108 = vsub.s32 0, %v92
    %v109 = vsel %vm107, %v108, %v92
    %v110 = vmul.u32.u64.compose %v109, 3435973837
    %v111 = vextract.low.u32 %v110
    %v112 = vextract.high.u32 %v110
    %v113 = vshrl.u32 %v112, 4
    %v114 = vmul.u32 %v113, 20
    %v115 = vsub.s32 %v109, %v114
    %v116 = vsub.s32 0, %v115
    %v117 = vsel %vm107, %v116, %v115
    %vm118 = vcmp.lt.s32.totalorder %v93, 0
    %v119 = vsub.s32 0, %v93
    %v120 = vsel %vm118, %v119, %v93
    %v121 = vmul.u32.u64.compose %v120, 3435973837
    %v122 = vextract.low.u32 %v121
    %v123 = vextract.high.u32 %v121
    %v124 = vshrl.u32 %v123, 4
    %v125 = vmul.u32 %v124, 20
    %v126 = vsub.s32 %v120, %v125
    %v127 = vsub.s32 0, %v126
    %v128 = vsel %vm118, %v127, %v126
    %vm129 = vcmp.lt.s32.totalorder %v94, 0
    %v130 = vsub.s32 0, %v94
    %v131 = vsel %vm129, %v130, %v94
    %v132 = vmul.u32.u64.compose %v131, 3435973837
    %v133 = vextract.low.u32 %v132
    %v134 = vextract.high.u32 %v132
    %v135 = vshrl.u32 %v134, 4
    %v136 = vmul.u32 %v135, 20
    %v137 = vsub.s32 %v131, %v136
    %v138 = vsub.s32 0, %v137
    %v139 = vsel %vm129, %v138, %v137
    %vm140 = vcmp.lt.s32.totalorder %v95, 0
    %v141 = vsub.s32 0, %v95
    %v142 = vsel %vm140, %v141, %v95
    %v143 = vmul.u32.u64.compose %v142, 3435973837
    %v144 = vextract.low.u32 %v143
    %v145 = vextract.high.u32 %v143
    %v146 = vshrl.u32 %v145, 4
    %v147 = vmul.u32 %v146, 20
    %v148 = vsub.s32 %v142, %v147
    %v149 = vsub.s32 0, %v148
    %v150 = vsel %vm140, %v149, %v148
    %vm151 = vcmp.ne.s32.totalorder %v106, 0
    %vm152 = vcmp.ne.s32.totalorder %v117, 0
    %vm153 = vcmp.ne.s32.totalorder %v128, 0
    %vm154 = vcmp.ne.s32.totalorder %v139, 0
    %vm155 = vcmp.ne.s32.totalorder %v150, 0
    %vm156 = vcmp.lt.s32.totalorder %v106, 0
    %vm157 = vcmp.lt.s32.totalorder %v117, 0
    %vm158 = vcmp.lt.s32.totalorder %v128, 0
    %vm159 = vcmp.lt.s32.totalorder %v139, 0
    %vm160 = vcmp.lt.s32.totalorder %v150, 0
    %vm161 = vmand %vm156, %vm151
    %vm162 = vmand %vm157, %vm152
    %vm163 = vmand %vm158, %vm153
    %vm164 = vmand %vm159, %vm154
    %vm165 = vmand %vm160, %vm155
    %v166 = vadd.s32 %v106, 20
    %v167 = vadd.s32 %v117, 20
    %v168 = vadd.s32 %v128, 20
    %v169 = vadd.s32 %v139, 20
    %v170 = vadd.s32 %v150, 20
    %v171 = vsel %vm161, %v166, %v106
    %v172 = vsel %vm162, %v167, %v117
    %v173 = vsel %vm163, %v168, %v128
    %v174 = vsel %vm164, %v169, %v139
    %v175 = vsel %vm165, %v170, %v150
    %vm176 = vcmp.ne.s32.totalorder %v171, 0
    %vm177 = vcmp.ne.s32.totalorder %v172, 0
    %vm178 = vcmp.ne.s32.totalorder %v173, 0
    %vm179 = vcmp.ne.s32.totalorder %v174, 0
    %vm180 = vcmp.ne.s32.totalorder %v175, 0
    %v181 = vsel %vm176, 1, 0
    %v182 = vsel %vm177, 1, 0
    %v183 = vsel %vm178, 1, 0
    %v184 = vsel %vm179, 1, 0
    %v185 = vsel %vm180, 1, 0
    %v186 = vcvt.s32.f32 %v181
    %v187 = vcvt.s32.f32 %v182
    %v188 = vcvt.s32.f32 %v183
    %v189 = vcvt.s32.f32 %v184
    %v190 = vcvt.s32.f32 %v185
    %v191 = vpack.c.bf16 %v187, %v186
    %v192 = vpack.c.bf16 %v189, %v188
    %v193 = vpack.c.bf16 %v190, %v190
    %v194 = vmul.bf16 %v73, %v191
    %v195 = vmul.bf16 %v59, %v192
    %v196 = vmul.bf16 %v67, %v193
    %vm197 = vcmp.ne.s32.totalorder %v171, 19
    %vm198 = vcmp.ne.s32.totalorder %v172, 19
    %vm199 = vcmp.ne.s32.totalorder %v173, 19
    %vm200 = vcmp.ne.s32.totalorder %v174, 19
    %vm201 = vcmp.ne.s32.totalorder %v175, 19
    %v202 = vsel %vm197, 1, 0
    %v203 = vsel %vm198, 1, 0
    %v204 = vsel %vm199, 1, 0
    %v205 = vsel %vm200, 1, 0
    %v206 = vsel %vm201, 1, 0
    %v207 = vcvt.s32.f32 %v202
    %v208 = vcvt.s32.f32 %v203
    %v209 = vcvt.s32.f32 %v204
    %v210 = vcvt.s32.f32 %v205
    %v211 = vcvt.s32.f32 %v206
    %v212 = vpack.c.bf16 %v208, %v207
    %v213 = vpack.c.bf16 %v210, %v209
    %v214 = vpack.c.bf16 %v211, %v211
    %v215 = vmul.bf16 %v78, %v212
    %v216 = vmul.bf16 %v81, %v213
    %v217 = vmul.bf16 %v89, %v214
    %v218 = vld [vmem:[#allocation2] sm:$0xf]
    %v219 = vld [vmem:[#allocation2 + $0x4] sm:$0xf]
    %v220 = vld [vmem:[#allocation2 + $0x8] sm:$0xf]
    %v221 = vld [vmem:[#allocation2 + $0xc] sm:$0xf]
    %v222 = vld [vmem:[#allocation2 + $0x10] sm:$0xf]
    %v223 = vld [vmem:[#allocation2 + $0x14] sm:$0xf]
    %v224 = vld [vmem:[#allocation2 + $0x18] sm:$0xf]
    %v225 = vld [vmem:[#allocation2 + $0x1c] sm:$0xf]
    %v226 = vld [vmem:[#allocation2 + $0x20] sm:$0xf]
    %v227 = vld [vmem:[#allocation2 + $0x24] sm:$0xf]
    %v228 = vld [vmem:[#allocation2 + $0x28] sm:$0xf]
    %v229 = vld [vmem:[#allocation2 + $0x2c] sm:$0xf]
    %v230 = vld [vmem:[#allocation2 + $0x30] sm:$0xf]
    %v231 = vld [vmem:[#allocation2 + $0x34] sm:$0xf]
    %v232 = vld [vmem:[#allocation2 + $0x38] sm:$0xf]
    %v233 = vld [vmem:[#allocation2 + $0x3c] sm:$0xf]
    %s234 = scalar_lea.vmem [#allocation2], 64
    %v235 = vld [vmem:[%s234] sm:$0xf]
    %v236 = vld [vmem:[%s234 + $0x4] sm:$0xf]
    %v237 = vld [vmem:[%s234 + $0x8] sm:$0xf]
    %v238 = vld [vmem:[%s234 + $0xc] sm:$0xf]
    %v239 = vld [vmem:[%s234 + $0x10] sm:$0xf]
    %v240 = vld [vmem:[%s234 + $0x14] sm:$0xf]
    %v241 = vld [vmem:[%s234 + $0x18] sm:$0xf]
    %v242 = vld [vmem:[%s234 + $0x1c] sm:$0xf]
    %v243 = vld [vmem:[%s234 + $0x20] sm:$0xf]
    %v244 = vld [vmem:[%s234 + $0x24] sm:$0xf]
    %v245 = vld [vmem:[%s234 + $0x28] sm:$0xf]
    %v246 = vld [vmem:[%s234 + $0x2c] sm:$0xf]
    %v247 = vld [vmem:[%s234 + $0x30] sm:$0xf]
    %v248 = vld [vmem:[%s234 + $0x34] sm:$0xf]
    %v249 = vld [vmem:[%s234 + $0x38] sm:$0xf]
    %v250 = vld [vmem:[%s234 + $0x3c] sm:$0xf]
    %v270 = vunpack.c.l.b16 %v235
    %v271 = vunpack.c.l.b16 %v236
    %v272 = vunpack.c.l.b16 %v237
    %v273 = vunpack.c.l.b16 %v238
    %v274 = vunpack.c.l.b16 %v239
    %v275 = vunpack.c.l.b16 %v240
    %v276 = vunpack.c.l.b16 %v241
    %v277 = vunpack.c.l.b16 %v242
    %v278 = vunpack.c.l.b16 %v243
    %v279 = vunpack.c.l.b16 %v244
    %v280 = vunpack.c.l.b16 %v245
    %v281 = vunpack.c.l.b16 %v246
    %v282 = vunpack.c.l.b16 %v247
    %v283 = vunpack.c.l.b16 %v248
    %v284 = vunpack.c.l.b16 %v249
    %v285 = vunpack.c.l.b16 %v250
    %v286 = vpack.c.b16 %v271, %v270
    %v287 = vpack.c.b16 %v273, %v272
    %v288 = vpack.c.b16 %v275, %v274
    %v289 = vpack.c.b16 %v277, %v276
    %v290 = vpack.c.b16 %v279, %v278
    %v291 = vpack.c.b16 %v281, %v280
    %v292 = vpack.c.b16 %v283, %v282
    %v293 = vpack.c.b16 %v285, %v284
    %302 = vmatprep.subr.bf16.mxu0 0
    %303 = vmatpush1.bf16.msra.mxu0 %v286
    %304 = vmatprep.subr.bf16.mxu0 0
    %305 = vmatpush1.bf16.msra.mxu0 %v287
    %306 = vmatprep.subr.bf16.mxu0 0
    %307 = vmatpush1.bf16.msra.mxu0 %v288
    %308 = vmatprep.subr.bf16.mxu0 0
    %309 = vmatpush1.bf16.msra.mxu0 %v289
    %310 = vmatprep.subr.bf16.mxu0 0
    %311 = vmatpush1.bf16.msra.mxu0 %v290
    %312 = vmatprep.subr.bf16.mxu0 0
    %313 = vmatpush1.bf16.msra.mxu0 %v291
    %314 = vmatprep.subr.bf16.mxu0 0
    %315 = vmatpush1.bf16.msra.mxu0 %v292
    %316 = vmatprep.subr.bf16.mxu0 0
    %317 = vmatpush1.bf16.msra.mxu0 %v293
    %318 = vmatprep.subr.bf16.mxu0 0
    %319 = vmatpush1.bf16.msra.mxu0 0
    %320 = vmatprep.subr.bf16.mxu0 0
    %321 = vmatpush1.bf16.msra.mxu0 0
    %322 = vmatprep.subr.bf16.mxu0 0
    %323 = vmatpush1.bf16.msra.mxu0 0
    %324 = vmatprep.subr.bf16.mxu0 0
    %325 = vmatpush1.bf16.msra.mxu0 0
    %326 = vmatprep.subr.bf16.mxu0 0
    %327 = vmatpush1.bf16.msra.mxu0 0
    %328 = vmatprep.subr.bf16.mxu0 0
    %329 = vmatpush1.bf16.msra.mxu0 0
    %330 = vmatprep.subr.bf16.mxu0 0
    %331 = vmatpush1.bf16.msra.mxu0 0
    %332 = vmatprep.subr.bf16.mxu0 0
    %333 = vmatpush1.bf16.msra.mxu0 0
    %334 = vmatprep.mubr.bf16.mxu0 0
    %335 = vmatmul.mubr.bf16.gmra.mrb[0].mxu0 %v41
    %v336 = vpop.f32.mrb[0].mxu0
    %v337 = vadd.f32 0.0, %v336
    %v338 = vpop.f32.mrb[0].mxu0
    %v339 = vpop.f32.mrb[0].mxu0
    %v340 = vadd.f32 0.0, %v339
    %v341 = vpop.f32.mrb[0].mxu0
    %342 = vmatprep.mubr.bf16.mxu0 0
    %343 = vmatmul.mubr.bf16.gmra.mrb[0].mxu0 %v42
    %v344 = vpop.f32.mrb[0].mxu0
    %v345 = vadd.f32 0.0, %v344
    %v346 = vpop.f32.mrb[0].mxu0
    %v347 = vpop.f32.mrb[0].mxu0
    %v348 = vadd.f32 0.0, %v347
    %v349 = vpop.f32.mrb[0].mxu0
    %350 = vmatprep.mubr.bf16.mxu0 0
    %351 = vmatmul.mubr.bf16.gmra.mrb[0].mxu0 %v43
    %v352 = vpop.f32.mrb[0].mxu0
    %v353 = vadd.f32 0.0, %v352
    %v354 = vpop.f32.mrb[0].mxu0
    %v355 = vpop.f32.mrb[0].mxu0
    %v356 = vpop.f32.mrb[0].mxu0
    %357 = vdwg.mxu0
    %v374 = vunpack.c.l.b16 %v218
    %v375 = vunpack.c.l.b16 %v219
    %v376 = vunpack.c.l.b16 %v220
    %v377 = vunpack.c.l.b16 %v221
    %v378 = vunpack.c.l.b16 %v222
    %v379 = vunpack.c.l.b16 %v223
    %v380 = vunpack.c.l.b16 %v224
    %v381 = vunpack.c.l.b16 %v225
    %v382 = vunpack.c.l.b16 %v226
    %v383 = vunpack.c.l.b16 %v227
    %v384 = vunpack.c.l.b16 %v228
    %v385 = vunpack.c.l.b16 %v229
    %v386 = vunpack.c.l.b16 %v230
    %v387 = vunpack.c.l.b16 %v231
    %v388 = vunpack.c.l.b16 %v232
    %v389 = vunpack.c.l.b16 %v233
    %v390 = vpack.c.b16 %v375, %v374
    %v391 = vpack.c.b16 %v377, %v376
    %v392 = vpack.c.b16 %v379, %v378
    %v393 = vpack.c.b16 %v381, %v380
    %v394 = vpack.c.b16 %v383, %v382
    %v395 = vpack.c.b16 %v385, %v384
    %v396 = vpack.c.b16 %v387, %v386
    %v397 = vpack.c.b16 %v389, %v388
    %406 = vmatprep.subr.bf16.mxu0 0
    %407 = vmatpush1.bf16.msra.mxu0 %v390
    %408 = vmatprep.subr.bf16.mxu0 0
    %409 = vmatpush1.bf16.msra.mxu0 %v391
    %410 = vmatprep.subr.bf16.mxu0 0
    %411 = vmatpush1.bf16.msra.mxu0 %v392
    %412 = vmatprep.subr.bf16.mxu0 0
    %413 = vmatpush1.bf16.msra.mxu0 %v393
    %414 = vmatprep.subr.bf16.mxu0 0
    %415 = vmatpush1.bf16.msra.mxu0 %v394
    %416 = vmatprep.subr.bf16.mxu0 0
    %417 = vmatpush1.bf16.msra.mxu0 %v395
    %418 = vmatprep.subr.bf16.mxu0 0
    %419 = vmatpush1.bf16.msra.mxu0 %v396
    %420 = vmatprep.subr.bf16.mxu0 0
    %421 = vmatpush1.bf16.msra.mxu0 %v397
    %422 = vmatprep.subr.bf16.mxu0 0
    %423 = vmatpush1.bf16.msra.mxu0 0
    %424 = vmatprep.subr.bf16.mxu0 0
    %425 = vmatpush1.bf16.msra.mxu0 0
    %426 = vmatprep.subr.bf16.mxu0 0
    %427 = vmatpush1.bf16.msra.mxu0 0
    %428 = vmatprep.subr.bf16.mxu0 0
    %429 = vmatpush1.bf16.msra.mxu0 0
    %430 = vmatprep.subr.bf16.mxu0 0
    %431 = vmatpush1.bf16.msra.mxu0 0
    %432 = vmatprep.subr.bf16.mxu0 0
    %433 = vmatpush1.bf16.msra.mxu0 0
    %434 = vmatprep.subr.bf16.mxu0 0
    %435 = vmatpush1.bf16.msra.mxu0 0
    %436 = vmatprep.subr.bf16.mxu0 0
    %437 = vmatpush1.bf16.msra.mxu0 0
    %438 = vmatprep.mubr.bf16.mxu0 0
    %439 = vmatmul.mubr.bf16.gmra.mrb[0].mxu0 %v194
    %v440 = vpop.f32.mrb[0].mxu0
    %v441 = vadd.f32 %v337, %v440
    %v442 = vpop.f32.mrb[0].mxu0
    %v443 = vpop.f32.mrb[0].mxu0
    %v444 = vadd.f32 %v340, %v443
    %v445 = vpop.f32.mrb[0].mxu0
    %446 = vmatprep.mubr.bf16.mxu0 0
    %447 = vmatmul.mubr.bf16.gmra.mrb[0].mxu0 %v195
    %v448 = vpop.f32.mrb[0].mxu0
    %v449 = vadd.f32 %v345, %v448
    %v450 = vpop.f32.mrb[0].mxu0
    %v451 = vpop.f32.mrb[0].mxu0
    %v452 = vadd.f32 %v348, %v451
    %v453 = vpop.f32.mrb[0].mxu0
    %454 = vmatprep.mubr.bf16.mxu0 0
    %455 = vmatmul.mubr.bf16.gmra.mrb[0].mxu0 %v196
    %v456 = vpop.f32.mrb[0].mxu0
    %v457 = vadd.f32 %v353, %v456
    %v458 = vpop.f32.mrb[0].mxu0
    %v459 = vpop.f32.mrb[0].mxu0
    %v460 = vpop.f32.mrb[0].mxu0
    %461 = vdwg.mxu0
    %s462 = scalar_lea.vmem [#allocation2], 128
    %v463 = vld [vmem:[%s462] sm:$0xf]
    %v464 = vld [vmem:[%s462 + $0x4] sm:$0xf]
    %v465 = vld [vmem:[%s462 + $0x8] sm:$0xf]
    %v466 = vld [vmem:[%s462 + $0xc] sm:$0xf]
    %v467 = vld [vmem:[%s462 + $0x10] sm:$0xf]
    %v468 = vld [vmem:[%s462 + $0x14] sm:$0xf]
    %v469 = vld [vmem:[%s462 + $0x18] sm:$0xf]
    %v470 = vld [vmem:[%s462 + $0x1c] sm:$0xf]
    %v471 = vld [vmem:[%s462 + $0x20] sm:$0xf]
    %v472 = vld [vmem:[%s462 + $0x24] sm:$0xf]
    %v473 = vld [vmem:[%s462 + $0x28] sm:$0xf]
    %v474 = vld [vmem:[%s462 + $0x2c] sm:$0xf]
    %v475 = vld [vmem:[%s462 + $0x30] sm:$0xf]
    %v476 = vld [vmem:[%s462 + $0x34] sm:$0xf]
    %v477 = vld [vmem:[%s462 + $0x38] sm:$0xf]
    %v478 = vld [vmem:[%s462 + $0x3c] sm:$0xf]
    %v495 = vunpack.c.l.b16 %v463
    %v496 = vunpack.c.l.b16 %v464
    %v497 = vunpack.c.l.b16 %v465
    %v498 = vunpack.c.l.b16 %v466
    %v499 = vunpack.c.l.b16 %v467
    %v500 = vunpack.c.l.b16 %v468
    %v501 = vunpack.c.l.b16 %v469
    %v502 = vunpack.c.l.b16 %v470
    %v503 = vunpack.c.l.b16 %v471
    %v504 = vunpack.c.l.b16 %v472
    %v505 = vunpack.c.l.b16 %v473
    %v506 = vunpack.c.l.b16 %v474
    %v507 = vunpack.c.l.b16 %v475
    %v508 = vunpack.c.l.b16 %v476
    %v509 = vunpack.c.l.b16 %v477
    %v510 = vunpack.c.l.b16 %v478
    %v511 = vpack.c.b16 %v496, %v495
    %v512 = vpack.c.b16 %v498, %v497
    %v513 = vpack.c.b16 %v500, %v499
    %v514 = vpack.c.b16 %v502, %v501
    %v515 = vpack.c.b16 %v504, %v503
    %v516 = vpack.c.b16 %v506, %v505
    %v517 = vpack.c.b16 %v508, %v507
    %v518 = vpack.c.b16 %v510, %v509
    %527 = vmatprep.subr.bf16.mxu0 0
    %528 = vmatpush1.bf16.msra.mxu0 %v511
    %529 = vmatprep.subr.bf16.mxu0 0
    %530 = vmatpush1.bf16.msra.mxu0 %v512
    %531 = vmatprep.subr.bf16.mxu0 0
    %532 = vmatpush1.bf16.msra.mxu0 %v513
    %533 = vmatprep.subr.bf16.mxu0 0
    %534 = vmatpush1.bf16.msra.mxu0 %v514
    %535 = vmatprep.subr.bf16.mxu0 0
    %536 = vmatpush1.bf16.msra.mxu0 %v515
    %537 = vmatprep.subr.bf16.mxu0 0
    %538 = vmatpush1.bf16.msra.mxu0 %v516
    %539 = vmatprep.subr.bf16.mxu0 0
    %540 = vmatpush1.bf16.msra.mxu0 %v517
    %541 = vmatprep.subr.bf16.mxu0 0
    %542 = vmatpush1.bf16.msra.mxu0 %v518
    %543 = vmatprep.subr.bf16.mxu0 0
    %544 = vmatpush1.bf16.msra.mxu0 0
    %545 = vmatprep.subr.bf16.mxu0 0
    %546 = vmatpush1.bf16.msra.mxu0 0
    %547 = vmatprep.subr.bf16.mxu0 0
    %548 = vmatpush1.bf16.msra.mxu0 0
    %549 = vmatprep.subr.bf16.mxu0 0
    %550 = vmatpush1.bf16.msra.mxu0 0
    %551 = vmatprep.subr.bf16.mxu0 0
    %552 = vmatpush1.bf16.msra.mxu0 0
    %553 = vmatprep.subr.bf16.mxu0 0
    %554 = vmatpush1.bf16.msra.mxu0 0
    %555 = vmatprep.subr.bf16.mxu0 0
    %556 = vmatpush1.bf16.msra.mxu0 0
    %557 = vmatprep.subr.bf16.mxu0 0
    %558 = vmatpush1.bf16.msra.mxu0 0
    %559 = vmatprep.mubr.bf16.mxu0 0
    %560 = vmatmul.mubr.bf16.gmra.mrb[0].mxu0 %v215
    %v561 = vpop.f32.mrb[0].mxu0
    %v562 = vadd.f32 0.0, %v561
    %v563 = vpop.f32.mrb[0].mxu0
    %v564 = vpop.f32.mrb[0].mxu0
    %v565 = vadd.f32 0.0, %v564
    %v566 = vpop.f32.mrb[0].mxu0
    %567 = vmatprep.mubr.bf16.mxu0 0
    %568 = vmatmul.mubr.bf16.gmra.mrb[0].mxu0 %v216
    %v569 = vpop.f32.mrb[0].mxu0
    %v570 = vadd.f32 0.0, %v569
    %v571 = vpop.f32.mrb[0].mxu0
    %v572 = vpop.f32.mrb[0].mxu0
    %v573 = vadd.f32 0.0, %v572
    %v574 = vpop.f32.mrb[0].mxu0
    %575 = vmatprep.mubr.bf16.mxu0 0
    %576 = vmatmul.mubr.bf16.gmra.mrb[0].mxu0 %v217
    %v577 = vpop.f32.mrb[0].mxu0
    %v578 = vadd.f32 0.0, %v577
    %v579 = vpop.f32.mrb[0].mxu0
    %v580 = vpop.f32.mrb[0].mxu0
    %v581 = vpop.f32.mrb[0].mxu0
    %582 = vdwg.mxu0
    %v583 = vadd.f32 %v441, %v562
    %v584 = vadd.f32 %v444, %v565
    %v585 = vadd.f32 %v449, %v570
    %v586 = vadd.f32 %v452, %v573
    %v587 = vadd.f32 %v457, %v578
    %vm588 = vcmp.gt.f32.partialorder %v583, 0.0
    %vm589 = vcmp.gt.f32.partialorder %v584, 0.0
    %vm590 = vcmp.gt.f32.partialorder %v585, 0.0
    %vm591 = vcmp.gt.f32.partialorder %v586, 0.0
    %vm592 = vcmp.gt.f32.partialorder %v587, 0.0
    %v593 = vmul.f32 %v583, 1.442695
    %v594 = vpow.pop %v593
    %v595 = vmul.f32 %v584, 1.442695
    %v596 = vpow.pop %v595
    %v597 = vmul.f32 %v585, 1.442695
    %v598 = vpow.pop %v597
    %v599 = vmul.f32 %v586, 1.442695
    %v600 = vpow.pop %v599
    %v601 = vmul.f32 %v587, 1.442695
    %v602 = vpow.pop %v601
    %v603 = vsub.f32 %v594, 1.0
    %v604 = vsub.f32 %v596, 1.0
    %v605 = vsub.f32 %v598, 1.0
    %v606 = vsub.f32 %v600, 1.0
    %v607 = vsub.f32 %v602, 1.0
    %v608 = vmul.f32 %v603, 1.6732632
    %v609 = vmul.f32 %v604, 1.6732632
    %v610 = vmul.f32 %v605, 1.6732632
    %v611 = vmul.f32 %v606, 1.6732632
    %v612 = vmul.f32 %v607, 1.6732632
    %v613 = vsel %vm588, %v583, %v608
    %v614 = vsel %vm589, %v584, %v609
    %v615 = vsel %vm590, %v585, %v610
    %v616 = vsel %vm591, %v586, %v611
    %v617 = vsel %vm592, %v587, %v612
    %v618 = vmul.f32 %v613, 1.050701
    %v619 = vmul.f32 %v614, 1.050701
    %v620 = vmul.f32 %v615, 1.050701
    %v621 = vmul.f32 %v616, 1.050701
    %v622 = vmul.f32 %v617, 1.050701
    %623 = vst [vmem:[%s2] sm:$0xff] %v618
    %624 = vst [vmem:[%s2 + $0x8] sm:$0xff] %v619
    %625 = vst [vmem:[%s2 + $0x10] sm:$0xff] %v620
    %626 = vst [vmem:[%s2 + $0x18] sm:$0xff] %v621
    %627 = vst [vmem:[%s2 + $0x20] sm:$0xff] %v622
    // Predicated region
    $region14: #{dwresblock_pallas.1} parent=1 // pred_check
      _
    $region15: #{dwresblock_pallas.1} parent=1 // pred_check_branch
      %629 = sbr.rel (0) target = $region17
    $region16: #{dwresblock_pallas.1} parent=1 // pred_region
      _
    $region17: #{dwresblock_pallas.1} parent=1 // pred_fallthru
      _
    // Predicated region
    $region18: #{dwresblock_pallas.1} parent=1 // pred_check
      _
    $region19: #{dwresblock_pallas.1} parent=1 // pred_check_branch
      %631 = sbr.rel (0) target = $region21
    $region20: #{dwresblock_pallas.1} parent=1 // pred_region
      _
    $region21: #{dwresblock_pallas.1} parent=1 // pred_fallthru
      _
    %632 = vsyncpa [#allocation3], 1

</llo_original>
